<compile_context>
chip_gen: v5e
topology: v5e:2x2
jax: 0.10.0
libtpu: 0.0.40
codegen_flags: <defaults>
</compile_context>

<pallas_src>
import jax
import jax.numpy as jnp
from jax.experimental import pallas as pl
from jax.experimental.pallas import tpu as pltpu

LANES = 128  # vreg lane width


def _sublane_multiple(dtype) -> int:
    """Native sublane tile: 8 for 32-bit, 16 for 16-bit, 32 for 8-bit dtypes."""
    bits = jnp.dtype(dtype).itemsize * 8
    return max(8, 256 // bits)


def _scale_shift_kernel(w_ref, b_ref, x_ref, o_ref):
    # w_ref: (1, 1) in SMEM, b_ref: (1,) in SMEM
    # x_ref / o_ref: (br, 128) VMEM tiles of the lane-dense view
    o_ref[...] = x_ref[...] * w_ref[0, 0] + b_ref[0]


def _scale_shift_2d(x2d, weight, bias, *, block_rows):
    """y = x2d * w + b over a lane-dense (rows, 128) slab."""
    rows, lanes = x2d.shape
    sub = _sublane_multiple(x2d.dtype)

    if rows <= block_rows:
        br = rows                                   # single block == full array (always legal)
    else:
        br = max(sub, (block_rows // sub) * sub)    # dtype-aware sublane alignment
    grid = (pl.cdiv(rows, br),)                     # last block may be partial; Pallas masks it

    return pl.pallas_call(
        _scale_shift_kernel,
        out_shape=jax.ShapeDtypeStruct((rows, lanes), x2d.dtype),
        grid=grid,
        in_specs=[
            pl.BlockSpec(memory_space=pltpu.SMEM),         # weight (1, 1) scalar
            pl.BlockSpec(memory_space=pltpu.SMEM),         # bias (1,) scalar
            pl.BlockSpec((br, lanes), lambda i: (i, 0)),   # x tile
        ],
        out_specs=pl.BlockSpec((br, lanes), lambda i: (i, 0)),
        compiler_params=pltpu.CompilerParams(
            dimension_semantics=("parallel",)),
    )(weight, bias, x2d)


def linear_model_forward(x, weight, bias, *, block_rows=2048):
    """Pallas equivalent of LinearModel.forward: y = x @ weight.T + bias."""
    n, in_f = x.shape
    assert in_f == 1 and weight.shape == (1, 1) and bias.shape == (1,)

    total = n * in_f
    flat = x.reshape(total)

    main_total = (total // LANES) * LANES   # 128-divisible prefix
    pieces = []
    if main_total > 0:
        # When total % 128 == 0 this is a pure metadata view of the input
        # (no pad, no copy); otherwise only the prefix feeds the kernel.
        x2d = flat[:main_total].reshape(main_total // LANES, LANES)
        y2d = _scale_shift_2d(x2d, weight, bias, block_rows=block_rows)
        pieces.append(y2d.reshape(main_total))
    if main_total < total:
        # <=127-element ragged tail: tiny fused op, not worth a kernel launch.
        pieces.append(flat[main_total:] * weight[0, 0] + bias[0])

    out_flat = pieces[0] if len(pieces) == 1 else jnp.concatenate(pieces)
    return out_flat.reshape(n, in_f)


if __name__ == "__main__":
    key = jax.random.PRNGKey(0)
    kx, kw, kb = jax.random.split(key, 3)

    # PyTorch Linear(1, 1) default init:
    # uniform in [-1/sqrt(in_features), 1/sqrt(in_features)] = [-1, 1].
    weight = jax.random.uniform(kw, (1, 1), dtype=jnp.float32,
                                minval=-1.0, maxval=1.0)
    bias = jax.random.uniform(kb, (1,), dtype=jnp.float32,
                              minval=-1.0, maxval=1.0)

    def ref(xv):
        return xv @ weight.T + bias

    # 1) Fast path: total % 128 == 0 -> pure-metadata lane-dense view, one kernel call.
    x1 = jax.random.normal(kx, (256, 1), dtype=jnp.float32)
    y1 = jax.block_until_ready(linear_model_forward(x1, weight, bias))
    assert y1.shape == (256, 1)
    assert jnp.allclose(y1, ref(x1), atol=1e-6), "mismatch vs reference (N=256)"

    # 2) Tiny batch (all-tail path), matching the module's toy usage.
    x2 = jax.random.normal(kx, (8, 1), dtype=jnp.float32)
    y2 = jax.block_until_ready(linear_model_forward(x2, weight, bias))
    assert y2.shape == (8, 1)
    assert jnp.allclose(y2, ref(x2), atol=1e-6), "mismatch vs reference (N=8)"

    # 3) Ragged size + multi-block grid with a partial last block.
    #    (block_rows=8 only to force >1 grid step at a small size; not a perf config.)
    x3 = jax.random.normal(kx, (2611, 1), dtype=jnp.float32)
    y3 = jax.block_until_ready(
        linear_model_forward(x3, weight, bias, block_rows=8))
    assert y3.shape == (2611, 1)
    assert jnp.allclose(y3, ref(x3), atol=1e-6), "mismatch vs reference (N=2611)"

    print("KERNEL_OK")
</pallas_src>

<mosaic_0001>
module attributes {stable_mosaic.version = 11 : i64} {
  func.func @_scale_shift_kernel(%arg0: i32, %arg1: memref<1x1xf32, #tpu.memory_space<smem>>, %arg2: memref<1xf32, #tpu.memory_space<smem>>, %arg3: memref<2x128xf32, #tpu.memory_space<vmem>>, %arg4: memref<2x128xf32, #tpu.memory_space<vmem>>) attributes {dimension_semantics = [#tpu.dimension_semantics<parallel>], iteration_bounds = array<i64: 1>, scalar_prefetch = 0 : i64, scratch_operands = 0 : i64, tpu.core_type = #tpu.core_type<tc>, window_params = [{transform_indices = @transform_0, window_bounds = array<i64: 1, 1>}, {transform_indices = @transform_1, window_bounds = array<i64: 1>}, {transform_indices = @transform_2, window_bounds = array<i64: 2, 128>}, {transform_indices = @transform_3, window_bounds = array<i64: 2, 128>}]} {
    %c0 = arith.constant 0 : index
    %c0_0 = arith.constant 0 : index
    %0 = vector.load %arg3[%c0, %c0_0] : memref<2x128xf32, #tpu.memory_space<vmem>>, vector<2x128xf32>
    %c0_1 = arith.constant 0 : index
    %c0_2 = arith.constant 0 : index
    %1 = memref.load %arg1[%c0_1, %c0_2] : memref<1x1xf32, #tpu.memory_space<smem>>
    %2 = vector.broadcast %1 : f32 to vector<2x128xf32>
    %3 = arith.mulf %0, %2 : vector<2x128xf32>
    %c0_3 = arith.constant 0 : index
    %4 = memref.load %arg2[%c0_3] : memref<1xf32, #tpu.memory_space<smem>>
    %5 = vector.broadcast %4 : f32 to vector<2x128xf32>
    %6 = arith.addf %3, %5 : vector<2x128xf32>
    %c0_4 = arith.constant 0 : index
    %c0_5 = arith.constant 0 : index
    %7 = vector.load %arg4[%c0_4, %c0_5] : memref<2x128xf32, #tpu.memory_space<vmem>>, vector<2x128xf32>
    tpu.vector_store %arg4[%c0_4, %c0_5], %6 {strides = array<i32>} : memref<2x128xf32, #tpu.memory_space<vmem>>, vector<2x128xf32>,
    return
  }
  func.func @transform_0(%arg0: i32) -> (i32, i32) {
    %c0_i32 = arith.constant 0 : i32
    %c0_i32_0 = arith.constant 0 : i32
    %c0_i32_1 = arith.constant 0 : i32
    return %c0_i32, %c0_i32_0 : i32, i32
  }
  func.func @transform_1(%arg0: i32) -> i32 {
    %c0_i32 = arith.constant 0 : i32
    %c0_i32_0 = arith.constant 0 : i32
    return %c0_i32 : i32
  }
  func.func @transform_2(%arg0: i32) -> (i32, i32) {
    %c0_i32 = arith.constant 0 : i32
    %c0_i32_0 = arith.constant 0 : i32
    return %arg0, %c0_i32 : i32, i32
  }
  func.func @transform_3(%arg0: i32) -> (i32, i32) {
    %c0_i32 = arith.constant 0 : i32
    %c0_i32_0 = arith.constant 0 : i32
    return %arg0, %c0_i32 : i32, i32
  }
}

</mosaic_0001>

<llo_original>
// kernel: tpu_custom_call.1
$region0: #{tpu_custom_call.1}
  #allocation0 [shape = 'u32[]', space=smem, size = 0x4, offset = 0x4, fixed_abs, tag = 'smem constant byte address 0x4 - core index']
  #allocation1 [shape = 'u32[72,128]{1,0:T(1,128)}', space=vmem, size = 0x9000, scoped, tag = 'internal scratch']
  #allocation2 [shape = 'f32[1,1]{1,0:T(1,128)S(6)}', space=smem, size = 0x200, scoped, tag = 'scoped memory for tpu_custom_call.1']
  #allocation3 [shape = 'f32[1]{0:T(128)S(6)}', space=smem, size = 0x200, scoped, tag = 'scoped memory for tpu_custom_call.1']
  %s0 = inlined_call_operand.<no memory space> [shape: f32[1,1], index: 0, kind: input, shape index: {}]
  %s1 = inlined_call_operand.<no memory space> [shape: f32[1], index: 1, kind: input, shape index: {}]
  %s2 = inlined_call_operand.vmem [shape: f32[2,128], index: 2, kind: input, shape index: {}]
  %s3 = inlined_call_operand.hbm [shape: f32[2,128], index: 3, kind: output, shape index: {}]
  %s4 = sld [smem:[#allocation0]]
  $region22: #{tpu_custom_call.1} parent=0
    _
  %s6 = ssub.s32 1, %s4
  %s7 = scalar_select 0, %s6, %s4
  %8 = sst [smem:[#allocation2]] %s0
  %9 = sst [smem:[#allocation3]] %s1
  $region1: #{tpu_custom_call.1} parent=0
    #allocation4 [shape = 'u8[1024]{0}', space=vmem, size = 0x400, scoped, tag = 'output window, operand 0, single buffered']
    #allocation5 [shape = 's32[1]{0}', space=sflag, size = 0x4, scoped, tag = 'scoped memory for tpu_custom_call.1']
    %10 = vsyncpa [#allocation5], 0
    // Predicated region
    $region2: #{tpu_custom_call.1} parent=1 // pred_check
      _
    $region3: #{tpu_custom_call.1} parent=1 // pred_check_branch
      %12 = sbr.rel (0) target = $region5
    $region4: #{tpu_custom_call.1} parent=1 // pred_region
      _
    $region5: #{tpu_custom_call.1} parent=1 // pred_fallthru
      _
    // Predicated region
    $region6: #{tpu_custom_call.1} parent=1 // pred_check
      _
    $region7: #{tpu_custom_call.1} parent=1 // pred_check_branch
      %14 = sbr.rel (0) target = $region9
    $region8: #{tpu_custom_call.1} parent=1 // pred_region
      _
    $region9: #{tpu_custom_call.1} parent=1 // pred_fallthru
      _
    // Predicated region
    $region10: #{tpu_custom_call.1} parent=1 // pred_check
      _
    $region11: #{tpu_custom_call.1} parent=1 // pred_check_branch
      %16 = sbr.rel (0) target = $region13
    $region12: #{tpu_custom_call.1} parent=1 // pred_region
      _
    $region13: #{tpu_custom_call.1} parent=1 // pred_fallthru
      _
    %v17 = vld [vmem:[%s2] sm:$0x3]
    %s18 = sld [smem:[#allocation2]]
    %v19 = vstv %s18
    %v20 = vmul.f32 %v17, %v19
    %s21 = sld [smem:[#allocation3]]
    %v22 = vstv %s21
    %v23 = vadd.f32 %v20, %v22
    %24 = vst [vmem:[#allocation4] sm:$0x3] %v23
    // Predicated region
    $region14: #{tpu_custom_call.1} parent=1 // pred_check
      _
    $region15: #{tpu_custom_call.1} parent=1 // pred_check_branch
      %26 = sbr.rel (0) target = $region17
    $region16: #{tpu_custom_call.1} parent=1 // pred_region
      %28 = vsyncadd [#allocation5], 0
      %s30 = sshll.u32 [#allocation4], 4
      %s31 = int_to_ptr.vmem [resolvable:$true] %s30
      %s32 = sshll.u32 %s3, 4
      %s33 = int_to_ptr.hbm [resolvable:$true] %s32
      %35 = dma.vmem_to_hbm [thread:$0]  %s31, 32, %s33, [#allocation5]
    $region17: #{tpu_custom_call.1} parent=1 // pred_fallthru
      _
    // Predicated region
    $region18: #{tpu_custom_call.1} parent=1 // pred_check
      _
    $region19: #{tpu_custom_call.1} parent=1 // pred_check_branch
      %37 = sbr.rel (0) target = $region21
    $region20: #{tpu_custom_call.1} parent=1 // pred_region
      %39 = dma.done [#allocation5], 32
    $region21: #{tpu_custom_call.1} parent=1 // pred_fallthru
      _
    %40 = vsyncpa [#allocation5], 1

</llo_original>
